<compile_context>
chip_gen: v7x
topology: tpu7x:2x2x1
jax: 0.10.0
libtpu: 0.0.40
codegen_flags: <defaults>
</compile_context>

<pallas_src>
import functools

import jax
import jax.numpy as jnp
from jax import lax
from jax.experimental import pallas as pl
from jax.experimental.pallas import tpu as pltpu


def _device_kind():
    try:
        return jax.devices()[0].device_kind.lower()
    except Exception:
        return ""


def _max_tile_rows(kind):
    # (tile_rows, 128) f32 block = tile_rows * 512 B per input.  8192 rows ->
    # 4 MiB logits (+ up to 4 MiB f32 labels), double-buffered <= 16 MiB: fits the
    # 32 MiB default scoped VMEM on v6e / v7x.  v5e (16 MiB default) gets 4096.
    if "v5 lite" in kind or "v5lite" in kind or "v5e" in kind:
        return 4096
    if not kind or "v2" in kind or "v3" in kind:
        return 4096  # conservative on old / unknown parts
    return 8192


def _num_shards(kind, total_tiles):
    if total_tiles < 2:
        return 1
    # Two partial sums (one per TensorCore) only pay off on multi-TC chips.
    # TODO(synk): on v7x verify in xprof that axis 0 lands on both TCs; if not,
    # switch the shard axis to pltpu.CORE_PARALLEL / pl.core_map.
    if any(tag in kind for tag in ("v4", "v5p", "7")):
        return 2
    return 1


def _bce_sum_kernel(x_ref, y_ref, o_ref, acc_ref, *, total_tiles,
                    tiles_per_shard, last_tile_rows):
    """Accumulates stable BCE-with-logits over this shard's row tiles."""
    i = pl.program_id(1)                       # tile within shard (reduction axis)
    t = pl.program_id(0) * tiles_per_shard + i  # global tile index

    @pl.when(i == 0)
    def _init():
        acc_ref[...] = jnp.zeros_like(acc_ref)

    x = x_ref[...].astype(jnp.float32)
    y = y_ref[...].astype(jnp.float32)
    # max(x, 0) - x*y + log1p(exp(-|x|))
    loss = jnp.maximum(x, 0.0) - x * y + jnp.log1p(jnp.exp(-jnp.abs(x)))

    rows = loss.shape[0]  # static tile_rows

    def _accumulate(v):
        if rows % 8 == 0:
            # Fold the tile into (8,128) vreg-shaped partial sums: pure VALU adds,
            # no cross-lane/sublane XLU work in the steady-state loop.
            acc_ref[...] += v.reshape(rows // 8, 8, 128).sum(axis=0)
        else:
            # Tiny single-tile case: accumulator has the same shape as the tile.
            acc_ref[...] += v

    # Interior tiles: plain accumulate, no masking work at all.
    @pl.when(t < total_tiles - 1)
    def _interior():
        _accumulate(loss)

    # Final (possibly ragged / partially-DMA'd) tile: mask invalid rows with a
    # single row-index compare.  Must be a select, NOT multiply-by-mask, since
    # the unbacked rows hold undefined VMEM (possibly NaN/Inf).
    @pl.when(t == total_tiles - 1)
    def _last():
        row_idx = lax.broadcasted_iota(jnp.int32, loss.shape, 0)
        _accumulate(jnp.where(row_idx < last_tile_rows, loss, 0.0))

    # t > total_tiles - 1 only occurs for the single overshoot iteration of the
    # last shard when total_tiles is odd; its index_map is clamped to the last
    # block and neither accumulate branch fires, so it contributes nothing.
    # TODO(synk): add an interpret-mode test with odd total_tiles for this path.

    @pl.when(i == tiles_per_shard - 1)
    def _flush():
        o_ref[...] = acc_ref[...]


def cross_entropy(out, label):
    """Pallas equivalent of CrossEntropy().forward(out, label)."""
    x = jnp.squeeze(out)
    y = label
    if y.dtype == jnp.bool_:
        # Keep labels 1 byte/elem on the wire; the f32 cast happens in-kernel.
        y = y.astype(jnp.int8)
    assert x.shape == y.shape, (x.shape, y.shape)

    n = x.size
    xf = x.reshape(-1)
    yf = y.reshape(-1)

    rows = n // 128
    n_main = rows * 128
    tail = n - n_main

    # Ragged tail (< 128 elems): tiny plain-JAX reduction instead of a padded copy.
    tail_sum = jnp.float32(0.0)
    if tail:
        xt = xf[n_main:].astype(jnp.float32)
        yt = yf[n_main:].astype(jnp.float32)
        tail_sum = jnp.sum(jnp.maximum(xt, 0.0) - xt * yt
                           + jnp.log1p(jnp.exp(-jnp.abs(xt))))

    if rows == 0:
        # Degenerate (< 128 elements total): nothing lane-aligned to feed the kernel.
        return tail_sum / jnp.float32(n)

    if tail:
        xf = xf[:n_main]
        yf = yf[:n_main]
    x2 = xf.reshape(rows, 128)            # free view when n % 128 == 0
    y2 = yf.reshape(rows, 128)

    kind = _device_kind()
    max_rows = _max_tile_rows(kind)
    if rows <= max_rows:
        tile_rows = rows                  # full-dim block: always layout-legal
    else:
        tile_rows = max_rows              # multiple of 32: legal for f32/bf16/int8
    total_tiles = pl.cdiv(rows, tile_rows)
    num_shards = _num_shards(kind, total_tiles)
    tiles_per_shard = pl.cdiv(total_tiles, num_shards)
    overshoot = num_shards * tiles_per_shard != total_tiles
    last_tile_rows = rows - (total_tiles - 1) * tile_rows   # Python int, >= 1

    # Accumulator shape: (8,128) vreg tile in the common case, else the tile itself.
    acc_rows = 8 if tile_rows % 8 == 0 else tile_rows

    def data_index_map(s, i):
        t = s * tiles_per_shard + i
        if overshoot:                      # clamp the single overshoot iteration
            t = jnp.minimum(t, total_tiles - 1)
        return (t, 0)

    kernel = functools.partial(
        _bce_sum_kernel,
        total_tiles=total_tiles,
        tiles_per_shard=tiles_per_shard,
        last_tile_rows=last_tile_rows,
    )

    bytes_accessed = (n_main * (x.dtype.itemsize + y2.dtype.itemsize)
                      + num_shards * acc_rows * 128 * 4)
    cost = pl.CostEstimate(flops=6 * n_main, transcendentals=2 * n_main,
                           bytes_accessed=bytes_accessed)

    partials = pl.pallas_call(
        kernel,
        out_shape=jax.ShapeDtypeStruct((num_shards * acc_rows, 128), jnp.float32),
        grid=(num_shards, tiles_per_shard),
        in_specs=[
            pl.BlockSpec((tile_rows, 128), data_index_map),
            pl.BlockSpec((tile_rows, 128), data_index_map),
        ],
        out_specs=pl.BlockSpec((acc_rows, 128), lambda s, i: (s, 0)),
        scratch_shapes=[pltpu.VMEM((acc_rows, 128), jnp.float32)],
        compiler_params=pltpu.CompilerParams(
            dimension_semantics=("parallel", "arbitrary")),
        cost_estimate=cost,
    )(x2, y2)

    return (jnp.sum(partials) + tail_sum) / jnp.float32(n)


def _reference(out, label):
    x = jnp.squeeze(out).astype(jnp.float32)
    y = label.astype(jnp.float32)
    loss = jnp.maximum(x, 0.0) - x * y + jnp.log1p(jnp.exp(-jnp.abs(x)))
    return jnp.mean(loss)


if __name__ == "__main__":
    key = jax.random.PRNGKey(0)
    k1, k2 = jax.random.split(key)

    # out: NCHW logits with a singleton channel (squeezed away); label: binary targets.
    out = jax.random.normal(k1, (2, 1, 16, 16), dtype=jnp.float32)
    label = jax.random.bernoulli(k2, p=0.5, shape=(2, 16, 16)).astype(jnp.float32)

    loss = jax.block_until_ready(cross_entropy(out, label))
    ref = jax.block_until_ready(_reference(out, label))
    assert jnp.allclose(loss, ref, atol=1e-5, rtol=1e-5), (loss, ref)

    print("KERNEL_OK")
</pallas_src>

<mosaic_0001>
module attributes {stable_mosaic.version = 11 : i64} {
  func.func @_bce_sum_kernel(%arg0: i32, %arg1: i32, %arg2: memref<4x128xf32, #tpu.memory_space<vmem>>, %arg3: memref<4x128xf32, #tpu.memory_space<vmem>>, %arg4: memref<4x128xf32, #tpu.memory_space<vmem>>, %arg5: memref<4x128xf32, #tpu.memory_space<vmem>>) attributes {dimension_semantics = [#tpu.dimension_semantics<parallel>, #tpu.dimension_semantics<arbitrary>], iteration_bounds = array<i64: 1, 1>, scalar_prefetch = 0 : i64, scratch_operands = 1 : i64, tpu.core_type = #tpu.core_type<tc>, window_params = [{transform_indices = @transform_0, window_bounds = array<i64: 4, 128>}, {transform_indices = @transform_1, window_bounds = array<i64: 4, 128>}, {transform_indices = @transform_2, window_bounds = array<i64: 4, 128>}]} {
    %c1_i32 = arith.constant 1 : i32
    %0 = arith.muli %arg0, %c1_i32 : i32
    %1 = arith.addi %0, %arg1 : i32
    %c0_i32 = arith.constant 0 : i32
    %2 = arith.cmpi eq, %arg1, %c0_i32 : i32
    %3 = arith.extui %2 : i1 to i32
    %c0_i32_0 = arith.constant 0 : i32
    %4 = arith.cmpi ne, %3, %c0_i32_0 : i32
    scf.if %4 {
      %cst_11 = arith.constant 0.000000e+00 : f32
      %26 = vector.broadcast %cst_11 : f32 to vector<4x128xf32>
      %c0_12 = arith.constant 0 : index
      %c0_13 = arith.constant 0 : index
      %27 = vector.load %arg5[%c0_12, %c0_13] : memref<4x128xf32, #tpu.memory_space<vmem>>, vector<4x128xf32>
      tpu.vector_store %arg5[%c0_12, %c0_13], %26 {strides = array<i32>} : memref<4x128xf32, #tpu.memory_space<vmem>>, vector<4x128xf32>,
    } else {
    }
    %c0 = arith.constant 0 : index
    %c0_1 = arith.constant 0 : index
    %5 = vector.load %arg2[%c0, %c0_1] : memref<4x128xf32, #tpu.memory_space<vmem>>, vector<4x128xf32>
    %c0_2 = arith.constant 0 : index
    %c0_3 = arith.constant 0 : index
    %6 = vector.load %arg3[%c0_2, %c0_3] : memref<4x128xf32, #tpu.memory_space<vmem>>, vector<4x128xf32>
    %cst = arith.constant 0.000000e+00 : f32
    %7 = vector.broadcast %cst : f32 to vector<4x128xf32>
    %8 = arith.maximumf %5, %7 : vector<4x128xf32>
    %9 = arith.mulf %5, %6 : vector<4x128xf32>
    %10 = arith.subf %8, %9 : vector<4x128xf32>
    %11 = math.absf %5 : vector<4x128xf32>
    %cst_4 = arith.constant 0.000000e+00 : f32
    %12 = vector.broadcast %cst_4 : f32 to vector<4x128xf32>
    %13 = arith.subf %12, %11 : vector<4x128xf32>
    %14 = math.exp %13 : vector<4x128xf32>
    %15 = math.log1p %14 : vector<4x128xf32>
    %16 = arith.addf %10, %15 : vector<4x128xf32>
    %c0_i32_5 = arith.constant 0 : i32
    %17 = arith.cmpi slt, %1, %c0_i32_5 : i32
    %18 = arith.extui %17 : i1 to i32
    %c0_i32_6 = arith.constant 0 : i32
    %19 = arith.cmpi ne, %18, %c0_i32_6 : i32
    scf.if %19 {
      %c0_11 = arith.constant 0 : index
      %c0_12 = arith.constant 0 : index
      %26 = vector.load %arg5[%c0_11, %c0_12] : memref<4x128xf32, #tpu.memory_space<vmem>>, vector<4x128xf32>
      %27 = arith.addf %26, %16 : vector<4x128xf32>
      %c0_13 = arith.constant 0 : index
      %c0_14 = arith.constant 0 : index
      %28 = vector.load %arg5[%c0_13, %c0_14] : memref<4x128xf32, #tpu.memory_space<vmem>>, vector<4x128xf32>
      tpu.vector_store %arg5[%c0_13, %c0_14], %27 {strides = array<i32>} : memref<4x128xf32, #tpu.memory_space<vmem>>, vector<4x128xf32>,
    } else {
    }
    %c0_i32_7 = arith.constant 0 : i32
    %20 = arith.cmpi eq, %1, %c0_i32_7 : i32
    %21 = arith.extui %20 : i1 to i32
    %c0_i32_8 = arith.constant 0 : i32
    %22 = arith.cmpi ne, %21, %c0_i32_8 : i32
    scf.if %22 {
      %26 = tpu.iota {dimensions = array<i32: 0>} : vector<4x128xi32>
      %c4_i32 = arith.constant 4 : i32
      %27 = vector.broadcast %c4_i32 : i32 to vector<4x128xi32>
      %28 = arith.cmpi slt, %26, %27 : vector<4x128xi32>
      %cst_11 = arith.constant 0.000000e+00 : f32
      %29 = vector.broadcast %cst_11 : f32 to vector<4x128xf32>
      %30 = arith.select %28, %16, %29 : vector<4x128xi1>, vector<4x128xf32>
      %c0_12 = arith.constant 0 : index
      %c0_13 = arith.constant 0 : index
      %31 = vector.load %arg5[%c0_12, %c0_13] : memref<4x128xf32, #tpu.memory_space<vmem>>, vector<4x128xf32>
      %32 = arith.addf %31, %30 : vector<4x128xf32>
      %c0_14 = arith.constant 0 : index
      %c0_15 = arith.constant 0 : index
      %33 = vector.load %arg5[%c0_14, %c0_15] : memref<4x128xf32, #tpu.memory_space<vmem>>, vector<4x128xf32>
      tpu.vector_store %arg5[%c0_14, %c0_15], %32 {strides = array<i32>} : memref<4x128xf32, #tpu.memory_space<vmem>>, vector<4x128xf32>,
    } else {
    }
    %c0_i32_9 = arith.constant 0 : i32
    %23 = arith.cmpi eq, %arg1, %c0_i32_9 : i32
    %24 = arith.extui %23 : i1 to i32
    %c0_i32_10 = arith.constant 0 : i32
    %25 = arith.cmpi ne, %24, %c0_i32_10 : i32
    scf.if %25 {
      %c0_11 = arith.constant 0 : index
      %c0_12 = arith.constant 0 : index
      %26 = vector.load %arg5[%c0_11, %c0_12] : memref<4x128xf32, #tpu.memory_space<vmem>>, vector<4x128xf32>
      %c0_13 = arith.constant 0 : index
      %c0_14 = arith.constant 0 : index
      %27 = vector.load %arg4[%c0_13, %c0_14] : memref<4x128xf32, #tpu.memory_space<vmem>>, vector<4x128xf32>
      tpu.vector_store %arg4[%c0_13, %c0_14], %26 {strides = array<i32>} : memref<4x128xf32, #tpu.memory_space<vmem>>, vector<4x128xf32>,
    } else {
    }
    return
  }
  func.func @transform_0(%arg0: i32, %arg1: i32) -> (i32, i32) {
    %c1_i32 = arith.constant 1 : i32
    %0 = arith.muli %arg0, %c1_i32 : i32
    %1 = arith.addi %0, %arg1 : i32
    %c0_i32 = arith.constant 0 : i32
    %c0_i32_0 = arith.constant 0 : i32
    return %1, %c0_i32 : i32, i32
  }
  func.func @transform_1(%arg0: i32, %arg1: i32) -> (i32, i32) {
    %c1_i32 = arith.constant 1 : i32
    %0 = arith.muli %arg0, %c1_i32 : i32
    %1 = arith.addi %0, %arg1 : i32
    %c0_i32 = arith.constant 0 : i32
    %c0_i32_0 = arith.constant 0 : i32
    return %1, %c0_i32 : i32, i32
  }
  func.func @transform_2(%arg0: i32, %arg1: i32) -> (i32, i32) {
    %c0_i32 = arith.constant 0 : i32
    %c0_i32_0 = arith.constant 0 : i32
    return %arg0, %c0_i32 : i32, i32
  }
}

</mosaic_0001>

<llo_original>
// kernel: tpu_custom_call.1
$region0: #{tpu_custom_call.1}
  #allocation0 [shape = 'u32[]', space=smem, size = 0x4, offset = 0x4, fixed_abs, tag = 'smem constant byte address 0x4 - core index']
  #allocation1 [shape = 'u32[144,128]{1,0:T(1,128)}', space=vmem, size = 0x12000, scoped, tag = 'internal scratch']
  #allocation2 [shape = 'f32[4,128]{1,0:T(4,128)}', space=vmem, size = 0x800, scoped, tag = 'scratch operand']
  %s0 = inlined_call_operand.hbm [shape: f32[4,128], index: 0, kind: input, shape index: {}]
  %s1 = inlined_call_operand.hbm [shape: f32[4,128], index: 1, kind: input, shape index: {}]
  %s2 = inlined_call_operand.hbm [shape: f32[4,128], index: 2, kind: output, shape index: {}]
  %s3 = sld [smem:[#allocation0]]
  $region42: #{tpu_custom_call.1} parent=0
    _
  %s5 = ssub.s32 1, %s3
  %s6 = scalar_select 0, %s5, %s3
  $region1: #{tpu_custom_call.1} parent=0
    #allocation3 [shape = 'u8[2048]{0}', space=vmem, size = 0x800, scoped, tag = 'input window, operand 0, single buffered']
    #allocation4 [shape = 's32[1]{0}', space=sflag, size = 0x4, scoped, tag = 'scoped memory for tpu_custom_call.1']
    #allocation5 [shape = 's32[1]{0}', space=sflag, size = 0x4, scoped, tag = 'scoped memory for tpu_custom_call.1']
    #allocation6 [shape = 'u8[2048]{0}', space=vmem, size = 0x800, scoped, tag = 'input window, operand 1, single buffered']
    #allocation7 [shape = 's32[1]{0}', space=sflag, size = 0x4, scoped, tag = 'scoped memory for tpu_custom_call.1']
    #allocation8 [shape = 'u8[2048]{0}', space=vmem, size = 0x800, scoped, tag = 'output window, operand 0, single buffered']
    %7 = vsyncpa [#allocation4], 0
    %8 = vsyncpa [#allocation7], 0
    %9 = vsyncpa [#allocation5], 0
    // Predicated region
    $region2: #{tpu_custom_call.1} parent=1 // pred_check
      _
    $region3: #{tpu_custom_call.1} parent=1 // pred_check_branch
      %11 = sbr.rel (0) target = $region5
    $region4: #{tpu_custom_call.1} parent=1 // pred_region
      %s12 = sadd.s32 0, 0
      %s14 = ssub.s32 64, 64
      %15 = vsyncadd [#allocation4], %s14
      %s16 = smul.addr %s12, 64
      %s17 = scalar_lea.hbm %s0, %s16
      %s19 = sshll.u32 [#allocation3], 4
      %s20 = int_to_ptr.vmem [resolvable:$true] %s19
      %22 = dma.hbm_to_vmem [thread:$0]  %s17, 64, %s20, [#allocation4]
    $region5: #{tpu_custom_call.1} parent=1 // pred_fallthru
      _
    // Predicated region
    $region6: #{tpu_custom_call.1} parent=1 // pred_check
      _
    $region7: #{tpu_custom_call.1} parent=1 // pred_check_branch
      %24 = sbr.rel (0) target = $region9
    $region8: #{tpu_custom_call.1} parent=1 // pred_region
      %s25 = sadd.s32 0, 0
      %s27 = ssub.s32 64, 64
      %28 = vsyncadd [#allocation7], %s27
      %s29 = smul.addr %s25, 64
      %s30 = scalar_lea.hbm %s1, %s29
      %s32 = sshll.u32 [#allocation6], 4
      %s33 = int_to_ptr.vmem [resolvable:$true] %s32
      %35 = dma.hbm_to_vmem [thread:$0]  %s30, 64, %s33, [#allocation7]
    $region9: #{tpu_custom_call.1} parent=1 // pred_fallthru
      _
    // Predicated region
    $region10: #{tpu_custom_call.1} parent=1 // pred_check
      _
    $region11: #{tpu_custom_call.1} parent=1 // pred_check_branch
      %37 = sbr.rel (0) target = $region13
    $region12: #{tpu_custom_call.1} parent=1 // pred_region
      %38 = dma.done [#allocation4], 64
    $region13: #{tpu_custom_call.1} parent=1 // pred_fallthru
      _
    // Predicated region
    $region14: #{tpu_custom_call.1} parent=1 // pred_check
      _
    $region15: #{tpu_custom_call.1} parent=1 // pred_check_branch
      %40 = sbr.rel (0) target = $region17
    $region16: #{tpu_custom_call.1} parent=1 // pred_region
      %41 = dma.done [#allocation7], 64
    $region17: #{tpu_custom_call.1} parent=1 // pred_fallthru
      _
    %s42 = sadd.s32 0, 0
    %s43 = sadd.s32 0, 0
    %s44 = sadd.s32 0, 0
    %p45 = scmp.eq.s32.totalorder 0, 0
    // Predicated region
    $region18: #{tpu_custom_call.1} parent=1 // pred_check
      %p46 = pneg %p45
    $region19: #{tpu_custom_call.1} parent=1 // pred_check_branch
      %48 = sbr.rel (%p46) target = $region21
    $region20: #{tpu_custom_call.1} parent=1 // pred_region
      %49 = vst [vmem:[#allocation2] sm:$0xf] 0.0
    $region21: #{tpu_custom_call.1} parent=1 // pred_fallthru
      _
    %v50 = vld [vmem:[#allocation3] sm:$0xf]
    %v51 = vld [vmem:[#allocation6] sm:$0xf]
    %v52 = vmax.f32 %v50, 0.0
    %v53 = vmul.f32 %v50, %v51
    %v54 = vsub.f32 %v52, %v53
    %v55 = vand.u32 2147483647, %v50
    %v56 = vsub.f32 0.0, %v55
    %v57 = vmul.f32 %v56, 1.442695
    %v58 = vpow.pop %v57
    %v59 = vadd.f32 %v58, 1.0
    %v60 = vlog2.pop %v59
    %v61 = vmul.f32 %v60, 0.6931472
    %v62 = vmul.f32 -0.5, %v58
    %v63 = vadd.f32 %v62, 1.0
    %v64 = vmul.f32 %v63, %v58
    %v65 = vand.u32 2147483647, %v58
    %vm66 = vcmp.lt.f32.partialorder %v65, 0.0004427343
    %v67 = vsel %vm66, %v64, %v61
    %v68 = vadd.f32 %v54, %v67
    %p69 = scmp.lt.s32.totalorder %s44, 0
    // Predicated region
    $region22: #{tpu_custom_call.1} parent=1 // pred_check
      %p70 = pneg %p69
    $region23: #{tpu_custom_call.1} parent=1 // pred_check_branch
      %72 = sbr.rel (%p70) target = $region25
    $region24: #{tpu_custom_call.1} parent=1 // pred_region
      %v73 = vld [vmem:[#allocation2] sm:$0xf]
      %v74 = vadd.f32 %v73, %v68
      %75 = vst [vmem:[#allocation2] sm:$0xf] %v74
    $region25: #{tpu_custom_call.1} parent=1 // pred_fallthru
      _
    %p76 = scmp.eq.s32.totalorder %s44, 0
    // Predicated region
    $region26: #{tpu_custom_call.1} parent=1 // pred_check
      %p77 = pneg %p76
    $region27: #{tpu_custom_call.1} parent=1 // pred_check_branch
      %79 = sbr.rel (%p77) target = $region29
    $region28: #{tpu_custom_call.1} parent=1 // pred_region
      %v80 = vlaneseq
      %v81 = vshrl.u32 %v80, 7
      %vm82 = vcmp.lt.s32.totalorder %v81, 4
      %v83 = vsel %vm82, %v68, 0.0
      %v84 = vld [vmem:[#allocation2] sm:$0xf]
      %v85 = vadd.f32 %v84, %v83
      %86 = vst [vmem:[#allocation2] sm:$0xf] %v85
    $region29: #{tpu_custom_call.1} parent=1 // pred_fallthru
      _
    // Predicated region
    $region30: #{tpu_custom_call.1} parent=1 // pred_check
      %p87 = pneg %p45
    $region31: #{tpu_custom_call.1} parent=1 // pred_check_branch
      %89 = sbr.rel (%p87) target = $region33
    $region32: #{tpu_custom_call.1} parent=1 // pred_region
      %v90 = vld [vmem:[#allocation2] sm:$0xf]
      %91 = vst [vmem:[#allocation8] sm:$0xf] %v90
    $region33: #{tpu_custom_call.1} parent=1 // pred_fallthru
      _
    // Predicated region
    $region34: #{tpu_custom_call.1} parent=1 // pred_check
      _
    $region35: #{tpu_custom_call.1} parent=1 // pred_check_branch
      %93 = sbr.rel (0) target = $region37
    $region36: #{tpu_custom_call.1} parent=1 // pred_region
      %s95 = ssub.s32 64, 64
      %96 = vsyncadd [#allocation5], %s95
      %s98 = sshll.u32 [#allocation8], 4
      %s99 = int_to_ptr.vmem [resolvable:$true] %s98
      %101 = dma.vmem_to_hbm [thread:$0]  %s99, 64, %s2, [#allocation5]
    $region37: #{tpu_custom_call.1} parent=1 // pred_fallthru
      _
    // Predicated region
    $region38: #{tpu_custom_call.1} parent=1 // pred_check
      _
    $region39: #{tpu_custom_call.1} parent=1 // pred_check_branch
      %103 = sbr.rel (0) target = $region41
    $region40: #{tpu_custom_call.1} parent=1 // pred_region
      %104 = dma.done [#allocation5], 64
    $region41: #{tpu_custom_call.1} parent=1 // pred_fallthru
      _
    %105 = vsyncpa [#allocation4], 1
    %106 = vsyncpa [#allocation7], 1
    %107 = vsyncpa [#allocation5], 1

</llo_original>
